<compile_context>
chip_gen: v7x
topology: tpu7x:2x2x1
jax: 0.10.0
libtpu: 0.0.40
codegen_flags: <defaults>
</compile_context>

<pallas_src>
import jax
import jax.numpy as jnp
from jax.experimental import pallas as pl
from jax.experimental.pallas import tpu as pltpu


def driving_kernel(img_ref, extras_ref, wt_ref, out_ref):
    # img_ref:    [B, C, HW] f32
    # extras_ref: [B, 5]     f32  (speed, roll, pitch, yaw, 1.0)
    # wt_ref:     [2, C+5]   f32  row 0 = steering weights, row 1 = throttle
    #                             cols = [w_img/HW (C), w_ext (4), bias (1)]
    # out_ref:    [B, 2]     f32  (tanh(steer), sigmoid(throttle))
    feat_img = jnp.sum(img_ref[...], axis=-1)                        # [B, C]
    feat = jnp.concatenate([feat_img, extras_ref[...]], axis=-1)     # [B, C+5]
    wt = wt_ref[...]                                                 # [2, C+5]
    # Keep the tiny contraction on the VPU/XLU (broadcast-mul + lane reduce).
    pre_s = jnp.sum(feat * wt[0:1, :], axis=-1, keepdims=True)       # [B, 1]
    pre_t = jnp.sum(feat * wt[1:2, :], axis=-1, keepdims=True)       # [B, 1]
    out_ref[...] = jnp.concatenate(
        [jnp.tanh(pre_s), jax.nn.sigmoid(pre_t)], axis=-1)           # [B, 2]


def driving_model(image, speed, euler_angles, w_img, w_ext, bias):
    """image: [B,C,H,W], speed: [B,1], euler_angles: [B,3].

    Params: w_img [C,2], w_ext [4,2], bias [1,2] (trace-time constants).
    """
    B, C, H, W = image.shape
    hw = H * W
    img = image.reshape(B, C, hw).astype(jnp.float32)
    extras = jnp.concatenate(
        [speed.astype(jnp.float32),
         euler_angles.astype(jnp.float32),
         jnp.ones((B, 1), jnp.float32)], axis=-1)                    # [B, 5]
    # Fuse all parameters into one operand; fold the mean's 1/HW into w_img.
    wt = jnp.concatenate(
        [w_img.astype(jnp.float32) / hw,
         w_ext.astype(jnp.float32),
         bias.astype(jnp.float32)], axis=0).T                        # [2, C+5]

    vmem = pl.BlockSpec(memory_space=pltpu.MemorySpace.VMEM)
    out = pl.pallas_call(
        driving_kernel,
        out_shape=jax.ShapeDtypeStruct((B, 2), jnp.float32),
        in_specs=[vmem, vmem, vmem],
        out_specs=vmem,
    )(img, extras, wt)
    return out[:, 0:1], out[:, 1:2]


def driving_model_ref(image, speed, euler_angles, w_img, w_ext, bias):
    """Pure-JAX reference for correctness checking."""
    B, C, H, W = image.shape
    feat_img = jnp.mean(image.reshape(B, C, H * W), axis=-1)
    extras = jnp.concatenate([speed, euler_angles], axis=-1)
    out = feat_img @ w_img + extras @ w_ext + bias
    return jnp.tanh(out[:, 0:1]), jax.nn.sigmoid(out[:, 1:2])


if __name__ == "__main__":
    B, C, H, W = 2, 4, 16, 16

    key = jax.random.PRNGKey(0)
    k_img, k_spd, k_eul = jax.random.split(key, 3)
    image = jax.random.normal(k_img, (B, C, H, W), dtype=jnp.float32)
    speed = jax.random.uniform(k_spd, (B, 1), dtype=jnp.float32) * 30.0
    euler_angles = jax.random.uniform(
        k_eul, (B, 3), dtype=jnp.float32, minval=-3.14, maxval=3.14
    )

    # Deterministic synthetic parameters for the dummy control head.
    w_img = (jnp.arange(C * 2, dtype=jnp.float32).reshape(C, 2) - 3.5) * 0.05
    w_ext = (jnp.arange(4 * 2, dtype=jnp.float32).reshape(4, 2) - 3.5) * 0.02
    bias = jnp.array([[0.1, -0.2]], dtype=jnp.float32)

    steering, throttle = driving_model(
        image, speed, euler_angles, w_img, w_ext, bias
    )
    jax.block_until_ready((steering, throttle))

    steering_ref, throttle_ref = driving_model_ref(
        image, speed, euler_angles, w_img, w_ext, bias
    )
    assert jnp.allclose(steering, steering_ref, atol=1e-5, rtol=1e-5)
    assert jnp.allclose(throttle, throttle_ref, atol=1e-5, rtol=1e-5)
    assert steering.shape == (B, 1) and throttle.shape == (B, 1)

    print("KERNEL_OK")
</pallas_src>

<mosaic_0001>
module attributes {stable_mosaic.version = 11 : i64} {
  func.func @driving_kernel(%arg0: memref<2x4x256xf32, #tpu.memory_space<vmem>>, %arg1: memref<2x5xf32, #tpu.memory_space<vmem>>, %arg2: memref<2x9xf32, #tpu.memory_space<vmem>>, %arg3: memref<2x2xf32, #tpu.memory_space<vmem>>) attributes {dimension_semantics = [], scalar_prefetch = 0 : i64, scratch_operands = 0 : i64, tpu.core_type = #tpu.core_type<tc>} {
    %c0 = arith.constant 0 : index
    %c0_0 = arith.constant 0 : index
    %c0_1 = arith.constant 0 : index
    %0 = vector.load %arg0[%c0, %c0_0, %c0_1] : memref<2x4x256xf32, #tpu.memory_space<vmem>>, vector<2x4x256xf32>
    %cst = arith.constant dense<0.000000e+00> : vector<2x4xf32>
    %1 = vector.multi_reduction <add>, %0, %cst [2] : vector<2x4x256xf32> to vector<2x4xf32>
    %c0_2 = arith.constant 0 : index
    %c0_3 = arith.constant 0 : index
    %2 = vector.load %arg1[%c0_2, %c0_3] : memref<2x5xf32, #tpu.memory_space<vmem>>, vector<2x5xf32>
    %3 = tpu.concatenate %1, %2 in 1 : vector<2x4xf32>, vector<2x5xf32> -> vector<2x9xf32>
    %c0_4 = arith.constant 0 : index
    %c0_5 = arith.constant 0 : index
    %4 = vector.load %arg2[%c0_4, %c0_5] : memref<2x9xf32, #tpu.memory_space<vmem>>, vector<2x9xf32>
    %5 = vector.extract_strided_slice %4 {offsets = [0, 0], sizes = [1, 9], strides = [1, 1]} : vector<2x9xf32> to vector<1x9xf32>
    %6 = vector.broadcast %5 : vector<1x9xf32> to vector<2x9xf32>
    %7 = arith.mulf %3, %6 : vector<2x9xf32>
    %cst_6 = arith.constant dense<0.000000e+00> : vector<2xf32>
    %8 = vector.multi_reduction <add>, %7, %cst_6 [1] : vector<2x9xf32> to vector<2xf32>
    %9 = vector.shape_cast %8 : vector<2xf32> to vector<2x1xf32>
    %10 = vector.extract_strided_slice %4 {offsets = [1, 0], sizes = [1, 9], strides = [1, 1]} : vector<2x9xf32> to vector<1x9xf32>
    %11 = vector.broadcast %10 : vector<1x9xf32> to vector<2x9xf32>
    %12 = arith.mulf %3, %11 : vector<2x9xf32>
    %cst_7 = arith.constant dense<0.000000e+00> : vector<2xf32>
    %13 = vector.multi_reduction <add>, %12, %cst_7 [1] : vector<2x9xf32> to vector<2xf32>
    %14 = vector.shape_cast %13 : vector<2xf32> to vector<2x1xf32>
    %15 = math.tanh %9 : vector<2x1xf32>
    %16 = arith.negf %14 : vector<2x1xf32>
    %17 = math.exp %16 : vector<2x1xf32>
    %cst_8 = arith.constant 1.000000e+00 : f32
    %18 = vector.broadcast %cst_8 : f32 to vector<2x1xf32>
    %19 = arith.addf %18, %17 : vector<2x1xf32>
    %20 = arith.divf %18, %19 : vector<2x1xf32>
    %21 = tpu.concatenate %15, %20 in 1 : vector<2x1xf32>, vector<2x1xf32> -> vector<2x2xf32>
    %c0_9 = arith.constant 0 : index
    %c0_10 = arith.constant 0 : index
    %22 = vector.load %arg3[%c0_9, %c0_10] : memref<2x2xf32, #tpu.memory_space<vmem>>, vector<2x2xf32>
    tpu.vector_store %arg3[%c0_9, %c0_10], %21 {strides = array<i32>} : memref<2x2xf32, #tpu.memory_space<vmem>>, vector<2x2xf32>,
    return
  }
}

</mosaic_0001>

<llo_original>
// kernel: tpu_custom_call.1
$region0: #{tpu_custom_call.1}
  #allocation0 [shape = 'u32[]', space=smem, size = 0x4, offset = 0x4, fixed_abs, tag = 'smem constant byte address 0x4 - core index']
  #allocation1 [shape = 'u32[144,128]{1,0:T(1,128)}', space=vmem, size = 0x12000, scoped, tag = 'internal scratch']
  %s0 = inlined_call_operand.hbm [shape: f32[2,4,256], index: 0, kind: input, shape index: {}]
  %s1 = inlined_call_operand.vmem [shape: f32[2,5], index: 1, kind: input, shape index: {}]
  %s2 = inlined_call_operand.vmem [shape: f32[2,9], index: 2, kind: input, shape index: {}]
  %s3 = inlined_call_operand.hbm [shape: f32[2,2], index: 3, kind: output, shape index: {}]
  %s4 = sld [smem:[#allocation0]]
  $region26: #{tpu_custom_call.1} parent=0
    _
  %s6 = ssub.s32 1, %s4
  %s7 = scalar_select 0, %s6, %s4
  $region1: #{tpu_custom_call.1} parent=0
    #allocation2 [shape = 'u8[8192]{0}', space=vmem, size = 0x2000, scoped, tag = 'input window, operand 0, single buffered']
    #allocation3 [shape = 's32[1]{0}', space=sflag, size = 0x4, scoped, tag = 'scoped memory for tpu_custom_call.1']
    #allocation4 [shape = 's32[1]{0}', space=sflag, size = 0x4, scoped, tag = 'scoped memory for tpu_custom_call.1']
    #allocation5 [shape = 'u8[1024]{0}', space=vmem, size = 0x400, scoped, tag = 'output window, operand 0, single buffered']
    %8 = vsyncpa [#allocation3], 0
    %9 = vsyncpa [#allocation4], 0
    // Predicated region
    $region2: #{tpu_custom_call.1} parent=1 // pred_check
      _
    $region3: #{tpu_custom_call.1} parent=1 // pred_check_branch
      %11 = sbr.rel (0) target = $region5
    $region4: #{tpu_custom_call.1} parent=1 // pred_region
      %s13 = ssub.s32 256, 256
      %14 = vsyncadd [#allocation3], %s13
      %s15 = sshll.u32 [#allocation2], 4
      %s16 = int_to_ptr.vmem [resolvable:$true] %s15
      %21 = dma.hbm_to_vmem [thread:$0]  %s0, 256, %s16, [#allocation3], 128, 128, 8
    $region5: #{tpu_custom_call.1} parent=1 // pred_fallthru
      _
    // Predicated region
    $region6: #{tpu_custom_call.1} parent=1 // pred_check
      _
    $region7: #{tpu_custom_call.1} parent=1 // pred_check_branch
      %23 = sbr.rel (0) target = $region9
    $region8: #{tpu_custom_call.1} parent=1 // pred_region
      _
    $region9: #{tpu_custom_call.1} parent=1 // pred_fallthru
      _
    // Predicated region
    $region10: #{tpu_custom_call.1} parent=1 // pred_check
      _
    $region11: #{tpu_custom_call.1} parent=1 // pred_check_branch
      %25 = sbr.rel (0) target = $region13
    $region12: #{tpu_custom_call.1} parent=1 // pred_region
      _
    $region13: #{tpu_custom_call.1} parent=1 // pred_fallthru
      _
    // Predicated region
    $region14: #{tpu_custom_call.1} parent=1 // pred_check
      _
    $region15: #{tpu_custom_call.1} parent=1 // pred_check_branch
      %27 = sbr.rel (0) target = $region17
    $region16: #{tpu_custom_call.1} parent=1 // pred_region
      %28 = dma.done [#allocation3], 256
    $region17: #{tpu_custom_call.1} parent=1 // pred_fallthru
      _
    %v29 = vld [vmem:[#allocation2] sm:$0xff]
    %v30 = vld [vmem:[#allocation2 + $0x8] sm:$0xff]
    %v33 = vcombine.high %v29, %v29
    %v34 = vcombine.high %v30, %v30
    %vm37 = vcmask 1043456
    %v38 = vsel %vm37, %v29, 0.0
    %v39 = vsel %vm37, %v33, 0.0
    %v40 = vadd.f32 %v38, %v39
    %41 = vadd.xlane.f32.xlu0 %v40
    %v42 = vpop.xlane.xlu0 %41
    %v43 = vsel %vm37, %v30, 0.0
    %v44 = vsel %vm37, %v34, 0.0
    %v45 = vadd.f32 %v43, %v44
    %46 = vadd.xlane.f32.xlu0 %v45
    %v47 = vpop.xlane.xlu0 %46
    %v48 = vld [vmem:[%s1] sm:$0x3]
    %v51 = vlaneseq
    %v52 = vand.u32 %v51, 127
    %v53 = vlaneseq
    %v54 = vshrl.u32 %v53, 7
    %v55 = vsub.s32 %v52, %v54
    %v56 = vrot.slane %v42, %v55
    %v57 = vlaneseq
    %v58 = vshrl.u32 %v57, 7
    %v59 = vsub.s32 %v52, %v58
    %v60 = vrot.slane %v47, %v59
    %vm61 = vcmask 1041409
    %v62 = vsel %vm61, %v60, %v56
    %65 = vrot.lane.b32.xlu0 %v48, 4
    %v66 = vpop.permute.xlu0 %65
    %vm68 = vcmask 31744
    %v69 = vsel %vm68, %v62, %v66
    %v70 = vld [vmem:[%s2] sm:$0x3]
    %v71 = vlaneseq
    %v72 = vshrl.u32 %v71, 7
    %v73 = vsub.s32 0, %v72
    %v74 = vrot.slane %v70, %v73
    %v75 = vmul.f32 %v69, %v74
    %vm76 = vcmask 66560
    %v77 = vsel %vm76, %v75, 0.0
    %78 = vadd.xlane.f32.xlu0 %v77
    %v79 = vpop.xlane.xlu0 %78
    %v80 = vlaneseq
    %v81 = vshrl.u32 %v80, 7
    %v82 = vsub.s32 1, %v81
    %v83 = vrot.slane %v70, %v82
    %v84 = vmul.f32 %v69, %v83
    %v85 = vsel %vm76, %v84, 0.0
    %86 = vadd.xlane.f32.xlu0 %v85
    %v87 = vpop.xlane.xlu0 %86
    %v88 = vtanh.pop %v79
    %v89 = vxor.u32 %v87, 2147483648
    %v90 = vmul.f32 %v89, 1.442695
    %v91 = vpow.pop %v90
    %v92 = vadd.f32 %v91, 1.0
    %v93 = vrcp.pop %v92
    %v94 = vmul.f32 1.0, %v93
    %vm95 = vcmask 7168
    %v96 = vsel %vm95, %v88, %v94
    %vm97 = vcmask 9216
    %98 = vst.msk [vmem:[#allocation5] sm:$0x3] %vm97, %v96
    // Predicated region
    $region18: #{tpu_custom_call.1} parent=1 // pred_check
      _
    $region19: #{tpu_custom_call.1} parent=1 // pred_check_branch
      %100 = sbr.rel (0) target = $region21
    $region20: #{tpu_custom_call.1} parent=1 // pred_region
      %s102 = ssub.s32 32, 32
      %103 = vsyncadd [#allocation4], %s102
      %s105 = sshll.u32 [#allocation5], 4
      %s106 = int_to_ptr.vmem [resolvable:$true] %s105
      %108 = dma.vmem_to_hbm [thread:$0]  %s106, 32, %s3, [#allocation4]
    $region21: #{tpu_custom_call.1} parent=1 // pred_fallthru
      _
    // Predicated region
    $region22: #{tpu_custom_call.1} parent=1 // pred_check
      _
    $region23: #{tpu_custom_call.1} parent=1 // pred_check_branch
      %110 = sbr.rel (0) target = $region25
    $region24: #{tpu_custom_call.1} parent=1 // pred_region
      %111 = dma.done [#allocation4], 32
    $region25: #{tpu_custom_call.1} parent=1 // pred_fallthru
      _
    %112 = vsyncpa [#allocation3], 1
    %113 = vsyncpa [#allocation4], 1

</llo_original>
